<compile_context>
chip_gen: v7x
topology: tpu7x:2x2x1
jax: 0.10.0
libtpu: 0.0.40
codegen_flags: <defaults>
</compile_context>

<pallas_src>
import numpy as np
import jax
import jax.numpy as jnp
from jax.experimental import pallas as pl
from jax.experimental.pallas import tpu as pltpu


# ----------------------------- Pallas kernel ------------------------------ #

def make_fused_backbone_kernel(n_blocks, kin0):
    """Fused kernel: chain of (matmul w/ kron-fused bf16 weight) + bias + ReLU.

    Occupancy features are all ones (M.preprocess_input with ones), so the
    lane-sparse (TM, A*Cin0) input is synthesized in-kernel instead of DMA'd.
    """
    def kernel(*refs):
        o_ref = refs[-1]
        tm = o_ref.shape[0]
        h = jnp.ones((tm, kin0), dtype=jnp.bfloat16)          # (TM, A*Cin0)
        for i in range(n_blocks):
            w = refs[2 * i][...]                              # (A*Cin_i, A*Cout_i) bf16
            b = refs[2 * i + 1][...]                          # (1, A*Cout_i)        f32
            acc = jnp.dot(h, w, preferred_element_type=jnp.float32)   # f32 MXU accum
            acc = jnp.maximum(acc + b, 0.0)                   # bias + ReLU in f32
            h = acc.astype(jnp.bfloat16) if i + 1 < n_blocks else acc
        o_ref[...] = h.astype(o_ref.dtype)
    return kernel


def _round_up(x, m):
    return -(-x // m) * m


def _pick_tile(m, *, target=2048, min_steps=2):
    """Point-axis tile size and padded slab length.

    Pads M up to a multiple of the tile (not merely of 8) so awkward M never
    falls back to 8-row tiles, and guarantees >= min_steps grid steps (when M
    is large enough) so v7x's two TensorCores both get work on the "parallel"
    axis.  No effect on single-TC v5e/v6e beyond tile sizing.
    """
    m8 = _round_up(max(m, 1), 8)
    if m8 >= target * min_steps:
        tile = target
    else:
        tile = max(_round_up(-(-m8 // min_steps), 8), 8)
    m_pad = _round_up(m8, tile)
    return tile, m_pad


def fused_backbone(m_points, big_ws, big_bs, *, out_dtype=jnp.bfloat16, tile_m=None):
    """Run the fused block chain for `m_points` rows of all-ones occupancy feats.

    Returns a lane-dense (m_points, A*C_last) activation slab.
    """
    n_blocks = len(big_ws)
    kin0 = big_ws[0].shape[0]
    cout = big_ws[-1].shape[1]

    if tile_m is None:
        tile_m, m_pad = _pick_tile(m_points)
    else:
        m_pad = _round_up(m_points, tile_m)
    grid = (m_pad // tile_m,)

    in_specs, args = [], []
    for w, b in zip(big_ws, big_bs):
        # Resident (constant index_map) weight & bias blocks.
        in_specs.append(pl.BlockSpec(w.shape, lambda i: (0, 0)))
        in_specs.append(pl.BlockSpec(b.shape, lambda i: (0, 0)))
        args += [w, b]

    # Explicit VMEM budget: double-buffered params + f32 intermediates for the
    # widest layer + double-buffered output, 2x headroom, clamped to stay well
    # under v7x's 64 MiB physical VMEM (v5e scoped default is only 16 MiB).
    param_bytes = sum(int(a.size) * a.dtype.itemsize for a in args)
    max_w = max(int(w.shape[1]) for w in big_ws)
    act_bytes = tile_m * max_w * 4 * 2
    out_bytes = tile_m * cout * np.dtype(out_dtype).itemsize * 2
    need = 2 * param_bytes + act_bytes + out_bytes
    vmem_limit = int(min(max(2 * need, 32 << 20), 48 << 20))

    out = pl.pallas_call(
        make_fused_backbone_kernel(n_blocks, kin0),
        out_shape=jax.ShapeDtypeStruct((m_pad, cout), out_dtype),
        grid_spec=pl.GridSpec(
            grid=grid,
            in_specs=in_specs,
            out_specs=pl.BlockSpec((tile_m, cout), lambda i: (i, 0)),
        ),
        compiler_params=pltpu.CompilerParams(
            dimension_semantics=("parallel",),
            vmem_limit_bytes=vmem_limit),
    )(*args)
    return out[:m_points]


# ------------------------------ plain-JAX glue ----------------------------- #

def get_anchors(kanchor):
    """Deterministic stand-in for vgtk L.get_anchors: kanchor z-axis rotations."""
    ang = jnp.arange(kanchor, dtype=jnp.float32) * (2.0 * jnp.pi / kanchor)
    c, s = jnp.cos(ang), jnp.sin(ang)
    z, o = jnp.zeros_like(c), jnp.ones_like(c)
    return jnp.stack([jnp.stack([c, -s, z], -1),
                      jnp.stack([s, c, z], -1),
                      jnp.stack([z, z, o], -1)], -2)            # (kanchor, 3, 3)


def init_params(key, dims, kanchor):
    """Deterministic synthetic weights for each backbone block."""
    blocks = []
    for i in range(len(dims) - 1):
        cin, cout = dims[i], dims[i + 1]
        key, kw, kb, kr = jax.random.split(key, 4)
        blocks.append(dict(
            w=jax.random.normal(kw, (cin, cout), jnp.float32) / jnp.sqrt(cin),
            b=0.1 * jax.random.normal(kb, (1, cout), jnp.float32),
            radj=(jax.random.normal(kr, (kanchor, kanchor), jnp.float32)
                  / kanchor + jnp.eye(kanchor, dtype=jnp.float32)),
        ))
    return blocks


def fuse_block_params(blk, kanchor, compute_dtype=jnp.bfloat16):
    """Fold the intra-anchor mixing into the channel-mix weight:
       W_big[(a,c),(p,d)] = radj[p,a]*w[c,d]  == kron(radj^T, w);  b_big[(p,d)] = b[d].
       Weight is cast to bf16 for the MXU; bias stays f32 for the f32 epilogue."""
    w, b, radj = blk["w"], blk["b"], blk["radj"]
    w_big = jnp.kron(radj.T, w).astype(compute_dtype)            # (A*Cin, A*Cout) bf16
    b_big = jnp.tile(b.reshape(1, -1), (1, kanchor)).astype(jnp.float32)  # (1, A*Cout)
    return w_big, b_big


def equiv_backbone_forward(x, blocks, kanchor, *, layout="nchw",
                           out_dtype=jnp.bfloat16):
    """Mirrors EquivBackbone.forward.

    layout="nchw"       -> feats [B, C, N, A] (torch-compatible, lane-sparse).
    layout="lane_dense" -> feats [B, N, A*C]  (preferred for TPU consumers).
    """
    if x.shape[-1] > 3:                                          # torch: permute(0, 2, 1)
        x = jnp.transpose(x, (0, 2, 1))                          # -> [B, N, 3]
    B, N, _ = x.shape
    xyz = jnp.transpose(x, (0, 2, 1))                            # [B, 3, N]
    # Occupancy "ones" features are generated inside the kernel; the lane-sparse
    # (B*N, A*Cin0) input array and its pipeline stage are eliminated.
    # NOTE(model shape): for best v6e/v7x MXU occupancy keep A*Cin a multiple
    # of 256 (K=128 here half-fills the 256-deep MXU; perfect for v5e).

    big_ws, big_bs = [], []
    for blk in blocks:
        wb, bb = fuse_block_params(blk, kanchor)
        big_ws.append(wb)
        big_bs.append(bb)

    out = fused_backbone(B * N, big_ws, big_bs, out_dtype=out_dtype)  # (B*N, A*C)
    # sample_idx = arange(N)  (stride-1 stand-in; see TODO above)

    C = blocks[-1]["w"].shape[1]
    if layout == "lane_dense":
        return xyz, out.reshape(B, N, kanchor * C)
    # Torch-compatible layout; puts A (small) on the lane axis -> lane-sparse.
    # Large-scale consumers should request layout="lane_dense" instead.
    feats_nchw = jnp.transpose(out.reshape(B, N, kanchor, C), (0, 3, 1, 2))  # [B,C,N,A]
    return xyz, feats_nchw


def reference_forward(x, blocks, kanchor):
    """Pure-jnp f32 reference (anchor-major, un-fused) for correctness checking."""
    if x.shape[-1] > 3:
        x = jnp.transpose(x, (0, 2, 1))
    B, N, _ = x.shape
    xyz = jnp.transpose(x, (0, 2, 1))
    feats = jnp.ones((kanchor, B * N, 1), jnp.float32)
    for blk in blocks:
        y = jnp.einsum("amc,cd->amd", feats, blk["w"])
        z = jnp.einsum("pa,amd->pmd", blk["radj"], y)
        feats = jnp.maximum(z + blk["b"].reshape(1, 1, -1), 0.0)
    C = feats.shape[-1]
    return xyz, jnp.transpose(feats.reshape(kanchor, B, N, C), (1, 3, 2, 0))


# ----------------------------------- main ---------------------------------- #

if __name__ == "__main__":
    key = jax.random.PRNGKey(0)
    kanchor = 4          # params['na'] / config.model.kanchor (small, synthetic)
    B, N = 2, 16         # batch, points
    dims = (1, 32, 64)   # occupancy feature -> block0 -> block1 channels

    kx, kp = jax.random.split(key)
    x = jax.random.normal(kx, (B, 3, N), jnp.float32)   # torch-style [B, 3, N] input
    anchors = get_anchors(kanchor)                      # stored like self.anchors
    blocks = init_params(kp, dims, kanchor)

    xyz, feats = equiv_backbone_forward(x, blocks, kanchor)
    jax.block_until_ready((xyz, feats))

    xyz_ref, feats_ref = reference_forward(x, blocks, kanchor)
    assert feats.shape == (B, dims[-1], N, kanchor), feats.shape
    assert jnp.allclose(xyz, xyz_ref, atol=1e-5)
    # bf16 MXU path with f32 accumulation: tolerances loosened vs f32 reference.
    assert jnp.allclose(feats.astype(jnp.float32), feats_ref, atol=5e-2, rtol=5e-2)

    print("KERNEL_OK")
</pallas_src>

<mosaic_0001>
module attributes {stable_mosaic.version = 11 : i64} {
  func.func @kernel(%arg0: i32, %arg1: memref<4x128xbf16, #tpu.memory_space<vmem>>, %arg2: memref<1x128xf32, #tpu.memory_space<vmem>>, %arg3: memref<128x256xbf16, #tpu.memory_space<vmem>>, %arg4: memref<1x256xf32, #tpu.memory_space<vmem>>, %arg5: memref<16x256xbf16, #tpu.memory_space<vmem>>) attributes {dimension_semantics = [#tpu.dimension_semantics<parallel>], iteration_bounds = array<i64: 2>, scalar_prefetch = 0 : i64, scratch_operands = 0 : i64, tpu.core_type = #tpu.core_type<tc>, window_params = [{pipeline_mode = #tpu.pipeline_mode<synchronous>, transform_indices = @transform_0, window_bounds = array<i64: 4, 128>}, {pipeline_mode = #tpu.pipeline_mode<synchronous>, transform_indices = @transform_1, window_bounds = array<i64: 1, 128>}, {pipeline_mode = #tpu.pipeline_mode<synchronous>, transform_indices = @transform_2, window_bounds = array<i64: 128, 256>}, {pipeline_mode = #tpu.pipeline_mode<synchronous>, transform_indices = @transform_3, window_bounds = array<i64: 1, 256>}, {transform_indices = @transform_4, window_bounds = array<i64: 16, 256>}]} {
    %cst = arith.constant 1.000000e+00 : bf16
    %0 = vector.broadcast %cst : bf16 to vector<16x4xbf16>
    %c0 = arith.constant 0 : index
    %c0_0 = arith.constant 0 : index
    %1 = vector.load %arg1[%c0, %c0_0] : memref<4x128xbf16, #tpu.memory_space<vmem>>, vector<4x128xbf16>
    %c0_1 = arith.constant 0 : index
    %c0_2 = arith.constant 0 : index
    %2 = vector.load %arg2[%c0_1, %c0_2] : memref<1x128xf32, #tpu.memory_space<vmem>>, vector<1x128xf32>
    %cst_3 = arith.constant dense<0.000000e+00> : vector<16x128xf32>
    %3 = tpu.matmul %0, %1, %cst_3 {dimension_numbers = #tpu.dot_dimension_numbers<[1], [0], [0], [1], [0, 0, 1, 1], [], []>} : vector<16x4xbf16>, vector<4x128xbf16>, vector<16x128xf32> -> vector<16x128xf32>
    %4 = vector.broadcast %2 : vector<1x128xf32> to vector<16x128xf32>
    %5 = arith.addf %3, %4 : vector<16x128xf32>
    %cst_4 = arith.constant 0.000000e+00 : f32
    %6 = vector.broadcast %cst_4 : f32 to vector<16x128xf32>
    %7 = arith.maximumf %5, %6 : vector<16x128xf32>
    %8 = arith.truncf %7 : vector<16x128xf32> to vector<16x128xbf16>
    %c0_5 = arith.constant 0 : index
    %c0_6 = arith.constant 0 : index
    %9 = vector.load %arg3[%c0_5, %c0_6] : memref<128x256xbf16, #tpu.memory_space<vmem>>, vector<128x256xbf16>
    %c0_7 = arith.constant 0 : index
    %c0_8 = arith.constant 0 : index
    %10 = vector.load %arg4[%c0_7, %c0_8] : memref<1x256xf32, #tpu.memory_space<vmem>>, vector<1x256xf32>
    %cst_9 = arith.constant dense<0.000000e+00> : vector<16x256xf32>
    %11 = tpu.matmul %8, %9, %cst_9 {dimension_numbers = #tpu.dot_dimension_numbers<[1], [0], [0], [1], [0, 0, 1, 1], [], []>} : vector<16x128xbf16>, vector<128x256xbf16>, vector<16x256xf32> -> vector<16x256xf32>
    %12 = vector.broadcast %10 : vector<1x256xf32> to vector<16x256xf32>
    %13 = arith.addf %11, %12 : vector<16x256xf32>
    %cst_10 = arith.constant 0.000000e+00 : f32
    %14 = vector.broadcast %cst_10 : f32 to vector<16x256xf32>
    %15 = arith.maximumf %13, %14 : vector<16x256xf32>
    %16 = arith.truncf %15 : vector<16x256xf32> to vector<16x256xbf16>
    %c0_11 = arith.constant 0 : index
    %c0_12 = arith.constant 0 : index
    %17 = vector.load %arg5[%c0_11, %c0_12] : memref<16x256xbf16, #tpu.memory_space<vmem>>, vector<16x256xbf16>
    tpu.vector_store %arg5[%c0_11, %c0_12], %16 {strides = array<i32>} : memref<16x256xbf16, #tpu.memory_space<vmem>>, vector<16x256xbf16>,
    return
  }
  func.func @transform_0(%arg0: i32) -> (i32, i32) {
    %c0_i32 = arith.constant 0 : i32
    %c0_i32_0 = arith.constant 0 : i32
    %c0_i32_1 = arith.constant 0 : i32
    return %c0_i32, %c0_i32_0 : i32, i32
  }
  func.func @transform_1(%arg0: i32) -> (i32, i32) {
    %c0_i32 = arith.constant 0 : i32
    %c0_i32_0 = arith.constant 0 : i32
    %c0_i32_1 = arith.constant 0 : i32
    return %c0_i32, %c0_i32_0 : i32, i32
  }
  func.func @transform_2(%arg0: i32) -> (i32, i32) {
    %c0_i32 = arith.constant 0 : i32
    %c0_i32_0 = arith.constant 0 : i32
    %c0_i32_1 = arith.constant 0 : i32
    return %c0_i32, %c0_i32_0 : i32, i32
  }
  func.func @transform_3(%arg0: i32) -> (i32, i32) {
    %c0_i32 = arith.constant 0 : i32
    %c0_i32_0 = arith.constant 0 : i32
    %c0_i32_1 = arith.constant 0 : i32
    return %c0_i32, %c0_i32_0 : i32, i32
  }
  func.func @transform_4(%arg0: i32) -> (i32, i32) {
    %c0_i32 = arith.constant 0 : i32
    %c0_i32_0 = arith.constant 0 : i32
    return %arg0, %c0_i32 : i32, i32
  }
}

</mosaic_0001>

<llo_original>
// kernel: tpu_custom_call.1
$region0: #{tpu_custom_call.1}
  #allocation0 [shape = 'u32[]', space=smem, size = 0x4, offset = 0x4, fixed_abs, tag = 'smem constant byte address 0x4 - core index']
  #allocation1 [shape = 'u32[144,128]{1,0:T(1,128)}', space=vmem, size = 0x12000, scoped, tag = 'internal scratch']
  %s0 = inlined_call_operand.hbm [shape: bf16[4,128], index: 0, kind: input, shape index: {}]
  %s1 = inlined_call_operand.vmem [shape: f32[1,128], index: 1, kind: input, shape index: {}]
  %s2 = inlined_call_operand.hbm [shape: bf16[128,256], index: 2, kind: input, shape index: {}]
  %s3 = inlined_call_operand.vmem [shape: f32[1,256], index: 3, kind: input, shape index: {}]
  %s4 = inlined_call_operand.hbm [shape: bf16[32,256], index: 4, kind: output, shape index: {}]
  %s5 = sld [smem:[#allocation0]]
  $region57: #{tpu_custom_call.1} parent=0
    _
  %s7 = ssub.s32 1, %s5
  %s8 = scalar_select 0, %s7, %s5
  $region1: #{tpu_custom_call.1} parent=0
    #allocation2 [shape = 'u8[1024]{0}', space=vmem, size = 0x400, scoped, tag = 'input window, operand 0, single buffered']
    #allocation3 [shape = 's32[2]{0}', space=sflag, size = 0x8, scoped, tag = 'scoped memory for tpu_custom_call.1']
    #allocation4 [shape = 's32[2]{0}', space=sflag, size = 0x8, scoped, tag = 'scoped memory for tpu_custom_call.1']
    #allocation5 [shape = 'u8[65536]{0}', space=vmem, size = 0x10000, scoped, tag = 'input window, operand 2, single buffered']
    #allocation6 [shape = 's32[1]{0}', space=sflag, size = 0x4, scoped, tag = 'scoped memory for tpu_custom_call.1']
    #allocation7 [shape = 'u8[16384]{0}', space=vmem, size = 0x4000, scoped, tag = 'output window, operand 0']
    %9 = vsyncpa [#allocation3], 0
    %10 = vsyncpa [#allocation6], 0
    %11 = vsyncpa [#allocation4], 0
    %s12 = scalar_lea.sflag [#allocation4], 1
    %13 = vsyncpa %s12, 0
    loop: start=0, step=1, limit=4
    $region2: #{tpu_custom_call.1} parent=1 // loop_pre_header
      _
    $region3: #{tpu_custom_call.1} parent=1 // loop_header
      %s15 = sphi 0, %s19
      %p16 = scmp.ge.s32.totalorder %s15, 4
      %s23 = sphi 0, %s23
      %s25 = sphi 0, %s23
      %s26 = sphi 0, %s25
      %s40 = sphi 0, %s26
      %s44 = sphi 0, %s44
      %s46 = sphi 0, %s44
      %s47 = sphi 0, %s46
      %s61 = sphi 0, %s47
      %s65 = sphi 0, %s65
      %s67 = sphi 0, %s65
      %s68 = sphi 0, %s67
      %s82 = sphi 0, %s68
      %s86 = sphi 0, %s86
      %s88 = sphi 0, %s86
      %s89 = sphi 0, %s88
      %s103 = sphi 0, %s89
      %s109 = sphi 0, %s111
      %s112 = sphi 0, %s109
      %s113 = sphi 0, %s112
      %s129 = sphi 0, %s113
    $region4: #{tpu_custom_call.1} parent=1 // loop_header_branch
      %18 = sbr.rel (%p16) target = $region8
    $region5: #{tpu_custom_call.1} parent=1 // loop_body
      %s20 = ssub.s32 %s15, 1
      %s21 = ssub.s32 %s15, 2
      %s22 = sadd.s32 %s15, 1
      %s24 = sadd.s32 %s23, 1
      %p27 = scmp.eq.s32.totalorder %s15, 1
      %p28 = scmp.ne.s32.totalorder %s23, %s25
      %p29 = scmp.eq.s32.totalorder %s15, 0
      %p30 = por %p28, %p29
      %p31 = scmp.ne.s32.totalorder %s23, %s25
      %p32 = scmp.eq.s32.totalorder %s20, 1
      %p33 = por %p31, %p32
      %p34 = scmp.ne.s32.totalorder %s25, %s26
      %p35 = scmp.eq.s32.totalorder %s20, 0
      %p36 = por %p34, %p35
      %p37 = scmp.ne.s32.totalorder %s25, %s26
      %p38 = scmp.eq.s32.totalorder %s21, 1
      %p39 = por %p37, %p38
      %p41 = scmp.ne.s32.totalorder %s26, %s40
      %p42 = scmp.eq.s32.totalorder %s21, 0
      %p43 = por %p41, %p42
      %s45 = sadd.s32 %s44, 1
      %p48 = scmp.eq.s32.totalorder %s15, 1
      %p49 = scmp.ne.s32.totalorder %s44, %s46
      %p50 = scmp.eq.s32.totalorder %s15, 0
      %p51 = por %p49, %p50
      %p52 = scmp.ne.s32.totalorder %s44, %s46
      %p53 = scmp.eq.s32.totalorder %s20, 1
      %p54 = por %p52, %p53
      %p55 = scmp.ne.s32.totalorder %s46, %s47
      %p56 = scmp.eq.s32.totalorder %s20, 0
      %p57 = por %p55, %p56
      %p58 = scmp.ne.s32.totalorder %s46, %s47
      %p59 = scmp.eq.s32.totalorder %s21, 1
      %p60 = por %p58, %p59
      %p62 = scmp.ne.s32.totalorder %s47, %s61
      %p63 = scmp.eq.s32.totalorder %s21, 0
      %p64 = por %p62, %p63
      %s66 = sadd.s32 %s65, 1
      %p69 = scmp.eq.s32.totalorder %s15, 1
      %p70 = scmp.ne.s32.totalorder %s65, %s67
      %p71 = scmp.eq.s32.totalorder %s15, 0
      %p72 = por %p70, %p71
      %p73 = scmp.ne.s32.totalorder %s65, %s67
      %p74 = scmp.eq.s32.totalorder %s20, 1
      %p75 = por %p73, %p74
      %p76 = scmp.ne.s32.totalorder %s67, %s68
      %p77 = scmp.eq.s32.totalorder %s20, 0
      %p78 = por %p76, %p77
      %p79 = scmp.ne.s32.totalorder %s67, %s68
      %p80 = scmp.eq.s32.totalorder %s21, 1
      %p81 = por %p79, %p80
      %p83 = scmp.ne.s32.totalorder %s68, %s82
      %p84 = scmp.eq.s32.totalorder %s21, 0
      %p85 = por %p83, %p84
      %s87 = sadd.s32 %s86, 1
      %p90 = scmp.eq.s32.totalorder %s15, 1
      %p91 = scmp.ne.s32.totalorder %s86, %s88
      %p92 = scmp.eq.s32.totalorder %s15, 0
      %p93 = por %p91, %p92
      %p94 = scmp.ne.s32.totalorder %s86, %s88
      %p95 = scmp.eq.s32.totalorder %s20, 1
      %p96 = por %p94, %p95
      %p97 = scmp.ne.s32.totalorder %s88, %s89
      %p98 = scmp.eq.s32.totalorder %s20, 0
      %p99 = por %p97, %p98
      %p100 = scmp.ne.s32.totalorder %s88, %s89
      %p101 = scmp.eq.s32.totalorder %s21, 1
      %p102 = por %p100, %p101
      %p104 = scmp.ne.s32.totalorder %s89, %s103
      %p105 = scmp.eq.s32.totalorder %s21, 0
      %p106 = por %p104, %p105
      %s107 = ssub.s32 %s15, %s22
      %p108 = scmp.eq.s32.totalorder %s107, 0
      %s110 = sadd.s32 %s109, 1
      %s111 = scalar_select %p108, %s109, %s110
      %p114 = pneg %p108
      %p115 = scmp.eq.s32.totalorder %s15, 1
      %p116 = por %p114, %p115
      %p117 = scmp.ne.s32.totalorder %s109, %s112
      %p118 = scmp.eq.s32.totalorder %s15, 0
      %p119 = por %p117, %p118
      %p120 = scmp.ne.s32.totalorder %s109, %s112
      %p121 = scmp.eq.s32.totalorder %s20, 1
      %p122 = por %p120, %p121
      %p123 = scmp.ne.s32.totalorder %s112, %s113
      %p124 = scmp.eq.s32.totalorder %s20, 0
      %p125 = por %p123, %p124
      %p126 = scmp.ne.s32.totalorder %s112, %s113
      %p127 = scmp.eq.s32.totalorder %s21, 1
      %p128 = por %p126, %p127
      %p130 = scmp.ne.s32.totalorder %s113, %s129
      %p131 = scmp.eq.s32.totalorder %s21, 0
      %p132 = por %p130, %p131
      %p133 = scmp.le.s32.totalorder 1, %s15
      %p134 = scmp.lt.s32.totalorder %s15, 3
      %p135 = pnand %p133, %p134
      %p136 = pneg %p135
      // Predicated region
      $region9: #{tpu_custom_call.1} parent=5 // pred_check
        _
      $region10: #{tpu_custom_call.1} parent=5 // pred_check_branch
        %138 = sbr.rel (%p135) target = $region12
      $region11: #{tpu_custom_call.1} parent=5 // pred_region
        %s139 = ssub.s32 %s15, 1
        // Predicated region
        $region13: #{tpu_custom_call.1} parent=11 // pred_check
          %p140 = pneg %p36
        $region14: #{tpu_custom_call.1} parent=11 // pred_check_branch
          %142 = sbr.rel (%p140) target = $region16
        $region15: #{tpu_custom_call.1} parent=11 // pred_region
          %s144 = ssub.s32 32, 32
          %145 = vsyncadd [#allocation3], %s144
          %s147 = sshll.u32 [#allocation2], 4
          %s148 = int_to_ptr.vmem [resolvable:$true] %s147
          %150 = dma.hbm_to_vmem [thread:$0]  %s0, 32, %s148, [#allocation3]
        $region16: #{tpu_custom_call.1} parent=11 // pred_fallthru
          _
        // Predicated region
        $region17: #{tpu_custom_call.1} parent=11 // pred_check
          %p151 = pneg %p57
        $region18: #{tpu_custom_call.1} parent=11 // pred_check_branch
          %153 = sbr.rel (%p151) target = $region20
        $region19: #{tpu_custom_call.1} parent=11 // pred_region
          _
        $region20: #{tpu_custom_call.1} parent=11 // pred_fallthru
          _
        // Predicated region
        $region21: #{tpu_custom_call.1} parent=11 // pred_check
          %p154 = pneg %p78
        $region22: #{tpu_custom_call.1} parent=11 // pred_check_branch
          %156 = sbr.rel (%p154) target = $region24
        $region23: #{tpu_custom_call.1} parent=11 // pred_region
          %s158 = ssub.s32 2048, 2048
          %159 = vsyncadd [#allocation6], %s158
          %s160 = sshll.u32 [#allocation5], 4
          %s161 = int_to_ptr.vmem [resolvable:$true] %s160
          %166 = dma.hbm_to_vmem [thread:$0]  %s2, 2048, %s161, [#allocation6], 128, 128, 8
        $region24: #{tpu_custom_call.1} parent=11 // pred_fallthru
          _
        // Predicated region
        $region25: #{tpu_custom_call.1} parent=11 // pred_check
          %p167 = pneg %p99
        $region26: #{tpu_custom_call.1} parent=11 // pred_check_branch
          %169 = sbr.rel (%p167) target = $region28
        $region27: #{tpu_custom_call.1} parent=11 // pred_region
          _
        $region28: #{tpu_custom_call.1} parent=11 // pred_fallthru
          _
      $region12: #{tpu_custom_call.1} parent=5 // pred_fallthru
        _
      %p170 = scmp.lt.s32.totalorder %s15, 2
      // Predicated region
      $region29: #{tpu_custom_call.1} parent=5 // pred_check
        %p171 = pneg %p170
      $region30: #{tpu_custom_call.1} parent=5 // pred_check_branch
        %173 = sbr.rel (%p171) target = $region32
      $region31: #{tpu_custom_call.1} parent=5 // pred_region
        _
      $region32: #{tpu_custom_call.1} parent=5 // pred_fallthru
        _
      %p174 = scmp.le.s32.totalorder 1, %s15
      %p175 = scmp.lt.s32.totalorder %s15, 3
      %p176 = pnand %p174, %p175
      %p177 = pneg %p176
      // Predicated region
      $region33: #{tpu_custom_call.1} parent=5 // pred_check
        _
      $region34: #{tpu_custom_call.1} parent=5 // pred_check_branch
        %179 = sbr.rel (%p176) target = $region36
      $region35: #{tpu_custom_call.1} parent=5 // pred_region
        %s180 = ssub.s32 %s15, 1
        // Predicated region
        $region37: #{tpu_custom_call.1} parent=35 // pred_check
          %p181 = pneg %p36
        $region38: #{tpu_custom_call.1} parent=35 // pred_check_branch
          %183 = sbr.rel (%p181) target = $region40
        $region39: #{tpu_custom_call.1} parent=35 // pred_region
          %184 = dma.done [#allocation3], 32
        $region40: #{tpu_custom_call.1} parent=35 // pred_fallthru
          _
        // Predicated region
        $region41: #{tpu_custom_call.1} parent=35 // pred_check
          %p185 = pneg %p78
        $region42: #{tpu_custom_call.1} parent=35 // pred_check_branch
          %187 = sbr.rel (%p185) target = $region44
        $region43: #{tpu_custom_call.1} parent=35 // pred_region
          %188 = dma.done [#allocation6], 2048
        $region44: #{tpu_custom_call.1} parent=35 // pred_fallthru
          _
        %p189 = pneg %p36
        %p190 = pneg %p33
        %p191 = pneg %p57
        %p192 = pneg %p54
        %p193 = pneg %p78
        %p194 = pneg %p75
        %p195 = pneg %p99
        %p196 = pneg %p96
        %p197 = pneg %p125
        %p198 = pneg %p122
        %s199 = sand.u32 %s112, 1
        %s200 = scalar_lea.sflag [#allocation4], %s199
        %s201 = sand.u32 %s112, 1
        %s202 = smul.addr %s201, 16
        %s203 = scalar_lea.vmem [#allocation7], %s202
        %s204 = smul.u32 2, %s20
        %v207 = vld [vmem:[#allocation2] sm:$0x3]
        %v208 = vld [vmem:[%s1] sm:$0x1]
        %v210 = vlaneseq
        %v211 = vshrl.u32 %v210, 7
        %v212 = vsub.s32 0, %v211
        %v213 = vrot.slane %v208, %v212
        %vm215 = vcmask 31744
        %v217 = vsel %vm215, 1065369472, 0
        %vm219 = vcmask 1041408
        %v221 = vsel %vm219, %v207, 0
        %223 = vmatprep.subr.bf16.mxu0 0
        %224 = vmatpush1.bf16.msra.mxu0 %v221
        %225 = vmatprep.subr.bf16.mxu0 0
        %226 = vmatpush1.bf16.msra.mxu0 0
        %227 = vmatprep.subr.bf16.mxu0 0
        %228 = vmatpush1.bf16.msra.mxu0 0
        %229 = vmatprep.subr.bf16.mxu0 0
        %230 = vmatpush1.bf16.msra.mxu0 0
        %231 = vmatprep.subr.bf16.mxu0 0
        %232 = vmatpush1.bf16.msra.mxu0 0
        %233 = vmatprep.subr.bf16.mxu0 0
        %234 = vmatpush1.bf16.msra.mxu0 0
        %235 = vmatprep.subr.bf16.mxu0 0
        %236 = vmatpush1.bf16.msra.mxu0 0
        %237 = vmatprep.subr.bf16.mxu0 0
        %238 = vmatpush1.bf16.msra.mxu0 0
        %239 = vmatprep.subr.bf16.mxu0 0
        %240 = vmatpush1.bf16.msra.mxu0 0
        %241 = vmatprep.subr.bf16.mxu0 0
        %242 = vmatpush1.bf16.msra.mxu0 0
        %243 = vmatprep.subr.bf16.mxu0 0
        %244 = vmatpush1.bf16.msra.mxu0 0
        %245 = vmatprep.subr.bf16.mxu0 0
        %246 = vmatpush1.bf16.msra.mxu0 0
        %247 = vmatprep.subr.bf16.mxu0 0
        %248 = vmatpush1.bf16.msra.mxu0 0
        %249 = vmatprep.subr.bf16.mxu0 0
        %250 = vmatpush1.bf16.msra.mxu0 0
        %251 = vmatprep.subr.bf16.mxu0 0
        %252 = vmatpush1.bf16.msra.mxu0 0
        %253 = vmatprep.subr.bf16.mxu0 0
        %254 = vmatpush1.bf16.msra.mxu0 0
        %255 = vmatprep.mubr.bf16.mxu0 0
        %256 = vmatmul.mubr.bf16.gmra.mrb[0].mxu0 %v217
        %v257 = vpop.f32.mrb[0].mxu0
        %v258 = vadd.f32 %v213, %v257
        %v259 = vpop.f32.mrb[0].mxu0
        %v260 = vpop.f32.mrb[0].mxu0
        %v261 = vadd.f32 %v213, %v260
        %v262 = vpop.f32.mrb[0].mxu0
        %263 = vdwg.mxu0
        %v264 = vmax.f32 %v258, 0.0
        %v265 = vmax.f32 %v261, 0.0
        %v266 = vpack.c.bf16 %v265, %v264
        %v267 = vld [vmem:[#allocation5] sm:$0xff]
        %v268 = vld [vmem:[#allocation5 + $0x8] sm:$0xff]
        %v269 = vld [vmem:[#allocation5 + $0x10] sm:$0xff]
        %v270 = vld [vmem:[#allocation5 + $0x18] sm:$0xff]
        %v271 = vld [vmem:[#allocation5 + $0x20] sm:$0xff]
        %v272 = vld [vmem:[#allocation5 + $0x28] sm:$0xff]
        %v273 = vld [vmem:[#allocation5 + $0x30] sm:$0xff]
        %v274 = vld [vmem:[#allocation5 + $0x38] sm:$0xff]
        %v275 = vld [vmem:[#allocation5 + $0x40] sm:$0xff]
        %v276 = vld [vmem:[#allocation5 + $0x48] sm:$0xff]
        %v277 = vld [vmem:[#allocation5 + $0x50] sm:$0xff]
        %v278 = vld [vmem:[#allocation5 + $0x58] sm:$0xff]
        %v279 = vld [vmem:[#allocation5 + $0x60] sm:$0xff]
        %v280 = vld [vmem:[#allocation5 + $0x68] sm:$0xff]
        %v281 = vld [vmem:[#allocation5 + $0x70] sm:$0xff]
        %v282 = vld [vmem:[#allocation5 + $0x78] sm:$0xff]
        %v283 = vld [vmem:[%s3] sm:$0x3]
        %v285 = vlaneseq
        %v286 = vshrl.u32 %v285, 7
        %v287 = vsub.s32 0, %v286
        %v288 = vrot.slane %v283, %v287
        %v289 = vlaneseq
        %v290 = vshrl.u32 %v289, 7
        %v291 = vsub.s32 1, %v290
        %v292 = vrot.slane %v283, %v291
        %v311 = vunpack.c.l.b16 %v267
        %v312 = vunpack.c.h.b16 %v267
        %v313 = vunpack.c.l.b16 %v268
        %v314 = vunpack.c.h.b16 %v268
        %v315 = vunpack.c.l.b16 %v269
        %v316 = vunpack.c.h.b16 %v269
        %v317 = vunpack.c.l.b16 %v270
        %v318 = vunpack.c.h.b16 %v270
        %v319 = vunpack.c.l.b16 %v271
        %v320 = vunpack.c.h.b16 %v271
        %v321 = vunpack.c.l.b16 %v272
        %v322 = vunpack.c.h.b16 %v272
        %v323 = vunpack.c.l.b16 %v273
        %v324 = vunpack.c.h.b16 %v273
        %v325 = vunpack.c.l.b16 %v274
        %v326 = vunpack.c.h.b16 %v274
        %v327 = vunpack.c.l.b16 %v275
        %v328 = vunpack.c.h.b16 %v275
        %v329 = vunpack.c.l.b16 %v276
        %v330 = vunpack.c.h.b16 %v276
        %v331 = vunpack.c.l.b16 %v277
        %v332 = vunpack.c.h.b16 %v277
        %v333 = vunpack.c.l.b16 %v278
        %v334 = vunpack.c.h.b16 %v278
        %v335 = vunpack.c.l.b16 %v279
        %v336 = vunpack.c.h.b16 %v279
        %v337 = vunpack.c.l.b16 %v280
        %v338 = vunpack.c.h.b16 %v280
        %v339 = vunpack.c.l.b16 %v281
        %v340 = vunpack.c.h.b16 %v281
        %v341 = vunpack.c.l.b16 %v282
        %v342 = vunpack.c.h.b16 %v282
        %v343 = vpack.c.b16 %v313, %v311
        %v344 = vpack.c.b16 %v314, %v312
        %v345 = vpack.c.b16 %v317, %v315
        %v346 = vpack.c.b16 %v318, %v316
        %v347 = vpack.c.b16 %v321, %v319
        %v348 = vpack.c.b16 %v322, %v320
        %v349 = vpack.c.b16 %v325, %v323
        %v350 = vpack.c.b16 %v326, %v324
        %v351 = vpack.c.b16 %v329, %v327
        %v352 = vpack.c.b16 %v330, %v328
        %v353 = vpack.c.b16 %v333, %v331
        %v354 = vpack.c.b16 %v334, %v332
        %v355 = vpack.c.b16 %v337, %v335
        %v356 = vpack.c.b16 %v338, %v336
        %v357 = vpack.c.b16 %v341, %v339
        %v358 = vpack.c.b16 %v342, %v340
        %375 = vmatprep.subr.bf16.mxu0 %v344
        %376 = vmatpush1.bf16.msra.mxu0 %v343
        %377 = vmatprep.subr.bf16.mxu0 %v346
        %378 = vmatpush1.bf16.msra.mxu0 %v345
        %379 = vmatprep.subr.bf16.mxu0 %v348
        %380 = vmatpush1.bf16.msra.mxu0 %v347
        %381 = vmatprep.subr.bf16.mxu0 %v350
        %382 = vmatpush1.bf16.msra.mxu0 %v349
        %383 = vmatprep.subr.bf16.mxu0 %v352
        %384 = vmatpush1.bf16.msra.mxu0 %v351
        %385 = vmatprep.subr.bf16.mxu0 %v354
        %386 = vmatpush1.bf16.msra.mxu0 %v353
        %387 = vmatprep.subr.bf16.mxu0 %v356
        %388 = vmatpush1.bf16.msra.mxu0 %v355
        %389 = vmatprep.subr.bf16.mxu0 %v358
        %390 = vmatpush1.bf16.msra.mxu0 %v357
        %391 = vmatprep.subr.bf16.mxu0 0
        %392 = vmatpush1.bf16.msra.mxu0 0
        %393 = vmatprep.subr.bf16.mxu0 0
        %394 = vmatpush1.bf16.msra.mxu0 0
        %395 = vmatprep.subr.bf16.mxu0 0
        %396 = vmatpush1.bf16.msra.mxu0 0
        %397 = vmatprep.subr.bf16.mxu0 0
        %398 = vmatpush1.bf16.msra.mxu0 0
        %399 = vmatprep.subr.bf16.mxu0 0
        %400 = vmatpush1.bf16.msra.mxu0 0
        %401 = vmatprep.subr.bf16.mxu0 0
        %402 = vmatpush1.bf16.msra.mxu0 0
        %403 = vmatprep.subr.bf16.mxu0 0
        %404 = vmatpush1.bf16.msra.mxu0 0
        %405 = vmatprep.subr.bf16.mxu0 0
        %406 = vmatpush1.bf16.msra.mxu0 0
        %407 = vmatprep.mubr.bf16.mxu0 0
        %408 = vmatmul.mubr.bf16.gmra.mrb[0].mxu0 %v266
        %v409 = vpop.f32.mrb[0].mxu0
        %v410 = vadd.f32 %v288, %v409
        %v411 = vpop.f32.mrb[0].mxu0
        %v412 = vadd.f32 %v292, %v411
        %v413 = vpop.f32.mrb[0].mxu0
        %v414 = vadd.f32 %v288, %v413
        %v415 = vpop.f32.mrb[0].mxu0
        %v416 = vadd.f32 %v292, %v415
        %417 = vdwg.mxu0
        %v418 = vmax.f32 %v410, 0.0
        %v419 = vmax.f32 %v412, 0.0
        %v420 = vmax.f32 %v414, 0.0
        %v421 = vmax.f32 %v416, 0.0
        %v422 = vpack.c.bf16 %v420, %v418
        %v423 = vpack.c.bf16 %v421, %v419
        %v426 = vunpack.c.l.b16 %v422
        %v427 = vunpack.c.l.b16 %v423
        %v428 = vunpack.c.h.b16 %v422
        %v429 = vunpack.c.h.b16 %v423
        %v430 = vpack.c.b16 %v427, %v426
        %v431 = vpack.c.b16 %v429, %v428
        %434 = vst [vmem:[%s203] sm:$0xff] %v430
        %435 = vst [vmem:[%s203 + $0x8] sm:$0xff] %v431
        %s436 = sand.u32 %s112, 1
        %s437 = scalar_lea.sflag [#allocation4], %s436
        %s438 = sand.u32 %s112, 1
        %s439 = smul.addr %s438, 16
        %s440 = scalar_lea.vmem [#allocation7], %s439
        // Predicated region
        $region45: #{tpu_custom_call.1} parent=35 // pred_check
          %p441 = pneg %p122
        $region46: #{tpu_custom_call.1} parent=35 // pred_check_branch
          %443 = sbr.rel (%p441) target = $region48
        $region47: #{tpu_custom_call.1} parent=35 // pred_region
          %s444 = smul.u32 2, %s20
          %s446 = ssub.s32 256, 256
          %447 = vsyncadd %s437, %s446
          %s448 = smul.addr %s444, 2
          %s449 = smul.addr %s448, 64
          %s450 = scalar_lea.hbm %s4, %s449
          %s451 = sshll.u32 %s440, 4
          %s452 = int_to_ptr.vmem [resolvable:$true] %s451
          %457 = dma.vmem_to_hbm [thread:$0]  %s452, 256, %s450, %s437, 128, 128, 8
        $region48: #{tpu_custom_call.1} parent=35 // pred_fallthru
          _
      $region36: #{tpu_custom_call.1} parent=5 // pred_fallthru
        _
      %p458 = scmp.le.s32.totalorder 2, %s15
      // Predicated region
      $region49: #{tpu_custom_call.1} parent=5 // pred_check
        %p459 = pneg %p458
      $region50: #{tpu_custom_call.1} parent=5 // pred_check_branch
        %461 = sbr.rel (%p459) target = $region52
      $region51: #{tpu_custom_call.1} parent=5 // pred_region
        %s462 = ssub.s32 %s15, 2
        // Predicated region
        $region53: #{tpu_custom_call.1} parent=51 // pred_check
          %p463 = pneg %p128
        $region54: #{tpu_custom_call.1} parent=51 // pred_check_branch
          %465 = sbr.rel (%p463) target = $region56
        $region55: #{tpu_custom_call.1} parent=51 // pred_region
          %s466 = sand.u32 %s113, 1
          %s467 = scalar_lea.sflag [#allocation4], %s466
          %s468 = sand.u32 %s113, 1
          %s469 = smul.addr %s468, 16
          %s470 = scalar_lea.vmem [#allocation7], %s469
          %471 = dma.done %s467, 256
        $region56: #{tpu_custom_call.1} parent=51 // pred_fallthru
          _
      $region52: #{tpu_custom_call.1} parent=5 // pred_fallthru
        _
    $region6: #{tpu_custom_call.1} parent=1 // loop_footer
      %s19 = sadd.s32 1, %s15
    $region7: #{tpu_custom_call.1} parent=1 // loop_footer_branch
      %14 = sbr.rel target = $region3
    $region8: #{tpu_custom_call.1} parent=1 // loop_exit
      _
    %472 = vsyncpa [#allocation3], 1
    %s473 = scalar_lea.sflag [#allocation3], 1
    %474 = vsyncpa %s473, 1
    %475 = vsyncpa [#allocation6], 1
    %476 = vsyncpa [#allocation4], 1
    %s477 = scalar_lea.sflag [#allocation4], 1
    %478 = vsyncpa %s477, 1

</llo_original>
